<compile_context>
chip_gen: v7x
topology: tpu7x:2x2x1
jax: 0.10.0
libtpu: 0.0.40
codegen_flags: <defaults>
</compile_context>

<pallas_src>
import functools

import jax
import jax.numpy as jnp
import numpy as np
from jax.experimental import pallas as pl
from jax.experimental.pallas import tpu as pltpu


def _svl_kernel(e_ref, p_ref, g_ref, o_ref, *, rows_per_tile, total_rows, need_mask):
    """One grid step over rows_per_tile packed rows (each packs F original rows of D)."""
    i = pl.program_id(0)

    p = p_ref[...].astype(jnp.float32)   # (TM, W)
    g = g_ref[...].astype(jnp.float32)   # (TM, W)
    e = e_ref[...]                        # (W, F) block-diagonal selector, pre-scaled 1/D

    d = p - g
    s = p + g

    # Three MXU matmuls replace the four-moment formulation.
    mean_d = jnp.dot(d, e, preferred_element_type=jnp.float32)       # E[p] - E[g]
    mean_s = jnp.dot(s, e, preferred_element_type=jnp.float32)       # E[p] + E[g]
    m2_d = jnp.dot(d * s, e, preferred_element_type=jnp.float32)     # E[p^2] - E[g^2]

    delta_var = m2_d - mean_d * mean_s                                # var_p - var_g
    contrib = jnp.abs(mean_d) + jnp.abs(delta_var)                    # (TM, F)

    # Unconditional (unmasked) partial-sum write; lane-dense output block.
    o_ref[...] = jnp.broadcast_to(jnp.sum(contrib), (1, 1, 128)).astype(jnp.float32)

    if need_mask:
        # Only the ragged last tile pays for the mask; interior tiles skip this at runtime.
        @pl.when(i == pl.num_programs(0) - 1)
        def _():
            row = jax.lax.broadcasted_iota(jnp.int32, contrib.shape, 0)
            valid = (i * rows_per_tile + row) < total_rows
            masked = jnp.where(valid, contrib, 0.0)
            o_ref[...] = jnp.broadcast_to(jnp.sum(masked), (1, 1, 128)).astype(jnp.float32)


def svl_loss(pred, gt, *, target_block_bytes=4 * 1024 * 1024):
    assert pred.shape == gt.shape, "pred and gt must have the same shape"
    D = int(pred.shape[-1])
    M = int(np.prod(pred.shape[:-1]))                 # number of reduced rows

    # Lane-dense packing: F rows of width D -> one packed row of width W = F*D (<= 128).
    F = max(1, 128 // D)
    F = min(F, M)
    W = F * D
    MP = M // F                                       # packed rows handled by the kernel
    M_main = MP * F
    M_tail = M - M_main                               # < F leftover rows (plain-jnp path)

    flat_p = pred.reshape(M, D)
    flat_g = gt.reshape(M, D)
    if M_tail > 0:
        p_main = flat_p[:M_main].reshape(MP, W)
        g_main = flat_g[:M_main].reshape(MP, W)
    else:                                             # contiguous re-view: no HBM copy
        p_main = pred.reshape(MP, W)
        g_main = gt.reshape(MP, W)

    # Row-tile size targeting ~target_block_bytes of *physical* VMEM per input block
    # (lanes pad up to a multiple of 128).
    itemsize = jnp.dtype(pred.dtype).itemsize
    lanes = ((W + 127) // 128) * 128
    phys_row_bytes = lanes * itemsize
    tm = max(8, target_block_bytes // phys_row_bytes)
    tm = (tm // 8) * 8                                # sublane-aligned when tiled
    if tm >= MP:
        tm = MP                                       # single tile (block == full dim is legal)
    grid_m = -(-MP // tm)                             # cdiv
    need_mask = (grid_m * tm != MP)

    # VMEM budget: 2 inputs x double-buffer x block + ~4 full-tile f32 temps (d, s, d*s, cast)
    # plus headroom; clamp to 64 MiB so it stays inside v7x's per-TC VMEM.
    block_bytes = tm * lanes * itemsize
    f32_block = tm * lanes * 4
    vmem_limit = int(min(max(2 * 2 * block_bytes + 4 * f32_block + (8 << 20), 32 << 20),
                         64 << 20))

    # Resident (W, F) selection matrix: column f picks lanes [f*D, (f+1)*D), pre-scaled 1/D.
    e_np = np.zeros((W, F), dtype=np.float32)
    for f in range(F):
        e_np[f * D:(f + 1) * D, f] = 1.0 / float(D)
    e = jnp.asarray(e_np)

    kernel = functools.partial(
        _svl_kernel, rows_per_tile=tm, total_rows=MP, need_mask=need_mask)

    partials = pl.pallas_call(
        kernel,
        out_shape=jax.ShapeDtypeStruct((grid_m, 1, 128), jnp.float32),
        grid_spec=pltpu.PrefetchScalarGridSpec(
            num_scalar_prefetch=0,
            grid=(grid_m,),
            in_specs=[
                pl.BlockSpec((W, F), lambda i: (0, 0)),     # selector: DMA'd once, resident
                pl.BlockSpec((tm, W), lambda i: (i, 0)),
                pl.BlockSpec((tm, W), lambda i: (i, 0)),
            ],
            out_specs=pl.BlockSpec((1, 1, 128), lambda i: (i, 0, 0)),
        ),
        compiler_params=pltpu.CompilerParams(
            dimension_semantics=("parallel",),              # no carried state
            vmem_limit_bytes=vmem_limit,
        ),
    )(e, p_main, g_main)

    total = jnp.sum(partials[:, 0, 0])

    if M_tail > 0:
        # Tiny remainder (< F rows): plain jnp keeps the bulk of the data lane-dense.
        tp = flat_p[M_main:].astype(jnp.float32)
        tg = flat_g[M_main:].astype(jnp.float32)
        tpm = jnp.mean(tp, axis=-1)
        tgm = jnp.mean(tg, axis=-1)
        tpv = jnp.mean((tp - tpm[:, None]) ** 2, axis=-1)
        tgv = jnp.mean((tg - tgm[:, None]) ** 2, axis=-1)
        total = total + jnp.sum(jnp.abs(tpm - tgm) + jnp.abs(tpv - tgv))

    # torch.mean over the leading dims: both loss terms share the 1/M divisor.
    return total / jnp.float32(M)


def svl_loss_ref(pred, gt):
    pred = pred.astype(jnp.float32)
    gt = gt.astype(jnp.float32)
    l1 = jnp.mean(jnp.abs(jnp.mean(pred, axis=-1) - jnp.mean(gt, axis=-1)))
    pm = jnp.mean(pred, axis=-1, keepdims=True)
    gm = jnp.mean(gt, axis=-1, keepdims=True)
    pv = jnp.mean((pred - pm) ** 2, axis=-1)
    gv = jnp.mean((gt - gm) ** 2, axis=-1)
    vl = jnp.mean(jnp.abs(pv - gv))
    return l1 + vl


if __name__ == "__main__":
    key = jax.random.PRNGKey(0)
    k1, k2, k3, k4, k5, k6 = jax.random.split(key, 6)

    # Case 1: shape implied by the module (reduce over the last dim). M=128, D=16 -> packs
    # to (16, 128), single tile.
    shape1 = (2, 4, 16, 16)
    pred1 = jax.random.normal(k1, shape1, dtype=jnp.float32)
    gt1 = jax.random.normal(k2, shape1, dtype=jnp.float32)
    out1 = jax.block_until_ready(svl_loss(pred1, gt1))
    ref1 = svl_loss_ref(pred1, gt1)
    np.testing.assert_allclose(np.asarray(out1), np.asarray(ref1), rtol=1e-5, atol=1e-5)

    # Case 2: multi-tile grid with a ragged last tile (exercises the pl.when mask path).
    shape2 = (2, 6, 10, 32)                            # M=120, D=32 -> packs to (30, 128)
    pred2 = jax.random.normal(k3, shape2, dtype=jnp.float32)
    gt2 = jax.random.normal(k4, shape2, dtype=jnp.float32)
    out2 = jax.block_until_ready(svl_loss(pred2, gt2, target_block_bytes=4096))
    ref2 = svl_loss_ref(pred2, gt2)
    np.testing.assert_allclose(np.asarray(out2), np.asarray(ref2), rtol=1e-5, atol=1e-5)

    # Case 3: M not divisible by F (exercises the lane-dense bulk + tiny jnp tail path).
    shape3 = (13, 16)                                  # M=13, D=16 -> F=8, main=8, tail=5
    pred3 = jax.random.normal(k5, shape3, dtype=jnp.float32)
    gt3 = jax.random.normal(k6, shape3, dtype=jnp.float32)
    out3 = jax.block_until_ready(svl_loss(pred3, gt3))
    ref3 = svl_loss_ref(pred3, gt3)
    np.testing.assert_allclose(np.asarray(out3), np.asarray(ref3), rtol=1e-5, atol=1e-5)

    print("KERNEL_OK")
</pallas_src>

<mosaic_0001>
module attributes {stable_mosaic.version = 11 : i64} {
  func.func @_svl_kernel(%arg0: i32, %arg1: memref<128x8xf32, #tpu.memory_space<vmem>>, %arg2: memref<16x128xf32, #tpu.memory_space<vmem>>, %arg3: memref<16x128xf32, #tpu.memory_space<vmem>>, %arg4: memref<1x1x128xf32, #tpu.memory_space<vmem>>) attributes {dimension_semantics = [#tpu.dimension_semantics<parallel>], iteration_bounds = array<i64: 1>, scalar_prefetch = 0 : i64, scratch_operands = 0 : i64, tpu.core_type = #tpu.core_type<tc>, window_params = [{pipeline_mode = #tpu.pipeline_mode<synchronous>, transform_indices = @transform_0, window_bounds = array<i64: 128, 8>}, {transform_indices = @transform_1, window_bounds = array<i64: 16, 128>}, {transform_indices = @transform_2, window_bounds = array<i64: 16, 128>}, {transform_indices = @transform_3, window_bounds = array<i64: 1, 1, 128>}]} {
    %c0 = arith.constant 0 : index
    %c0_0 = arith.constant 0 : index
    %0 = vector.load %arg2[%c0, %c0_0] : memref<16x128xf32, #tpu.memory_space<vmem>>, vector<16x128xf32>
    %c0_1 = arith.constant 0 : index
    %c0_2 = arith.constant 0 : index
    %1 = vector.load %arg3[%c0_1, %c0_2] : memref<16x128xf32, #tpu.memory_space<vmem>>, vector<16x128xf32>
    %c0_3 = arith.constant 0 : index
    %c0_4 = arith.constant 0 : index
    %2 = vector.load %arg1[%c0_3, %c0_4] : memref<128x8xf32, #tpu.memory_space<vmem>>, vector<128x8xf32>
    %3 = arith.subf %0, %1 : vector<16x128xf32>
    %4 = arith.addf %0, %1 : vector<16x128xf32>
    %cst = arith.constant dense<0.000000e+00> : vector<16x8xf32>
    %5 = tpu.matmul %3, %2, %cst {dimension_numbers = #tpu.dot_dimension_numbers<[1], [0], [0], [1], [0, 0, 1, 1], [], []>} : vector<16x128xf32>, vector<128x8xf32>, vector<16x8xf32> -> vector<16x8xf32>
    %cst_5 = arith.constant dense<0.000000e+00> : vector<16x8xf32>
    %6 = tpu.matmul %4, %2, %cst_5 {dimension_numbers = #tpu.dot_dimension_numbers<[1], [0], [0], [1], [0, 0, 1, 1], [], []>} : vector<16x128xf32>, vector<128x8xf32>, vector<16x8xf32> -> vector<16x8xf32>
    %7 = arith.mulf %3, %4 : vector<16x128xf32>
    %cst_6 = arith.constant dense<0.000000e+00> : vector<16x8xf32>
    %8 = tpu.matmul %7, %2, %cst_6 {dimension_numbers = #tpu.dot_dimension_numbers<[1], [0], [0], [1], [0, 0, 1, 1], [], []>} : vector<16x128xf32>, vector<128x8xf32>, vector<16x8xf32> -> vector<16x8xf32>
    %9 = arith.mulf %5, %6 : vector<16x8xf32>
    %10 = arith.subf %8, %9 : vector<16x8xf32>
    %11 = math.absf %5 : vector<16x8xf32>
    %12 = math.absf %10 : vector<16x8xf32>
    %13 = arith.addf %11, %12 : vector<16x8xf32>
    %14 = vector.shape_cast %13 : vector<16x8xf32> to vector<1x16x8xf32>
    %cst_7 = arith.constant dense<0.000000e+00> : vector<1xf32>
    %15 = vector.multi_reduction <add>, %14, %cst_7 [1, 2] : vector<1x16x8xf32> to vector<1xf32>
    %16 = vector.shape_cast %15 : vector<1xf32> to vector<1x1x1xf32>
    %17 = vector.extract %16[0, 0, 0] : f32 from vector<1x1x1xf32>
    %18 = vector.broadcast %17 : f32 to vector<1x1x128xf32>
    %c0_8 = arith.constant 0 : index
    %c0_9 = arith.constant 0 : index
    %c0_10 = arith.constant 0 : index
    %19 = vector.load %arg4[%c0_8, %c0_9, %c0_10] : memref<1x1x128xf32, #tpu.memory_space<vmem>>, vector<1x1x128xf32>
    tpu.vector_store %arg4[%c0_8, %c0_9, %c0_10], %18 {strides = array<i32>} : memref<1x1x128xf32, #tpu.memory_space<vmem>>, vector<1x1x128xf32>,
    return
  }
  func.func @transform_0(%arg0: i32) -> (i32, i32) {
    %c0_i32 = arith.constant 0 : i32
    %c0_i32_0 = arith.constant 0 : i32
    %c0_i32_1 = arith.constant 0 : i32
    return %c0_i32, %c0_i32_0 : i32, i32
  }
  func.func @transform_1(%arg0: i32) -> (i32, i32) {
    %c0_i32 = arith.constant 0 : i32
    %c0_i32_0 = arith.constant 0 : i32
    return %arg0, %c0_i32 : i32, i32
  }
  func.func @transform_2(%arg0: i32) -> (i32, i32) {
    %c0_i32 = arith.constant 0 : i32
    %c0_i32_0 = arith.constant 0 : i32
    return %arg0, %c0_i32 : i32, i32
  }
  func.func @transform_3(%arg0: i32) -> (i32, i32, i32) {
    %c0_i32 = arith.constant 0 : i32
    %c0_i32_0 = arith.constant 0 : i32
    %c0_i32_1 = arith.constant 0 : i32
    return %arg0, %c0_i32, %c0_i32_0 : i32, i32, i32
  }
}

</mosaic_0001>

<llo_original>
// kernel: tpu_custom_call.1
$region0: #{tpu_custom_call.1}
  #allocation0 [shape = 'u32[]', space=smem, size = 0x4, offset = 0x4, fixed_abs, tag = 'smem constant byte address 0x4 - core index']
  #allocation1 [shape = 'u32[144,128]{1,0:T(1,128)}', space=vmem, size = 0x12000, scoped, tag = 'internal scratch']
  %s0 = inlined_call_operand.vmem [shape: f32[128,8], index: 0, kind: input, shape index: {}]
  %s1 = inlined_call_operand.vmem [shape: f32[16,128], index: 1, kind: input, shape index: {}]
  %s2 = inlined_call_operand.vmem [shape: f32[16,128], index: 2, kind: input, shape index: {}]
  %s3 = inlined_call_operand.hbm [shape: f32[1,1,128], index: 3, kind: output, shape index: {}]
  %s4 = sld [smem:[#allocation0]]
  $region22: #{tpu_custom_call.1} parent=0
    _
  %s6 = ssub.s32 1, %s4
  %s7 = scalar_select 0, %s6, %s4
  $region1: #{tpu_custom_call.1} parent=0
    #allocation2 [shape = 'u8[512]{0}', space=vmem, size = 0x400, scoped, tag = 'output window, operand 0, single buffered']
    #allocation3 [shape = 's32[1]{0}', space=sflag, size = 0x4, scoped, tag = 'scoped memory for tpu_custom_call.1']
    %8 = vsyncpa [#allocation3], 0
    // Predicated region
    $region2: #{tpu_custom_call.1} parent=1 // pred_check
      _
    $region3: #{tpu_custom_call.1} parent=1 // pred_check_branch
      %10 = sbr.rel (0) target = $region5
    $region4: #{tpu_custom_call.1} parent=1 // pred_region
      _
    $region5: #{tpu_custom_call.1} parent=1 // pred_fallthru
      _
    // Predicated region
    $region6: #{tpu_custom_call.1} parent=1 // pred_check
      _
    $region7: #{tpu_custom_call.1} parent=1 // pred_check_branch
      %12 = sbr.rel (0) target = $region9
    $region8: #{tpu_custom_call.1} parent=1 // pred_region
      _
    $region9: #{tpu_custom_call.1} parent=1 // pred_fallthru
      _
    // Predicated region
    $region10: #{tpu_custom_call.1} parent=1 // pred_check
      _
    $region11: #{tpu_custom_call.1} parent=1 // pred_check_branch
      %14 = sbr.rel (0) target = $region13
    $region12: #{tpu_custom_call.1} parent=1 // pred_region
      _
    $region13: #{tpu_custom_call.1} parent=1 // pred_fallthru
      _
    %v15 = vld [vmem:[%s1] sm:$0xff]
    %v16 = vld [vmem:[%s1 + $0x8] sm:$0xff]
    %v17 = vld [vmem:[%s2] sm:$0xff]
    %v18 = vld [vmem:[%s2 + $0x8] sm:$0xff]
    %v19 = vld [vmem:[%s0] sm:$0xff]
    %v20 = vld [vmem:[%s0 + $0x8] sm:$0xff]
    %v21 = vld [vmem:[%s0 + $0x10] sm:$0xff]
    %v22 = vld [vmem:[%s0 + $0x18] sm:$0xff]
    %v23 = vld [vmem:[%s0 + $0x20] sm:$0xff]
    %v24 = vld [vmem:[%s0 + $0x28] sm:$0xff]
    %v25 = vld [vmem:[%s0 + $0x30] sm:$0xff]
    %v26 = vld [vmem:[%s0 + $0x38] sm:$0xff]
    %v27 = vld [vmem:[%s0 + $0x40] sm:$0xff]
    %v28 = vld [vmem:[%s0 + $0x48] sm:$0xff]
    %v29 = vld [vmem:[%s0 + $0x50] sm:$0xff]
    %v30 = vld [vmem:[%s0 + $0x58] sm:$0xff]
    %v31 = vld [vmem:[%s0 + $0x60] sm:$0xff]
    %v32 = vld [vmem:[%s0 + $0x68] sm:$0xff]
    %v33 = vld [vmem:[%s0 + $0x70] sm:$0xff]
    %v34 = vld [vmem:[%s0 + $0x78] sm:$0xff]
    %v35 = vsub.f32 %v15, %v17
    %v36 = vsub.f32 %v16, %v18
    %v37 = vadd.f32 %v15, %v17
    %v38 = vadd.f32 %v16, %v18
    %39 = vmatprep.subr.mxu0 0.0
    %40 = vmatpush1.msra.mxu0 %v19
    %41 = vmatprep.subr.mxu0 0.0
    %42 = vmatpush1.msra.mxu0 %v20
    %43 = vmatprep.subr.mxu0 0.0
    %44 = vmatpush1.msra.mxu0 %v21
    %45 = vmatprep.subr.mxu0 0.0
    %46 = vmatpush1.msra.mxu0 %v22
    %47 = vmatprep.subr.mxu0 0.0
    %48 = vmatpush1.msra.mxu0 %v23
    %49 = vmatprep.subr.mxu0 0.0
    %50 = vmatpush1.msra.mxu0 %v24
    %51 = vmatprep.subr.mxu0 0.0
    %52 = vmatpush1.msra.mxu0 %v25
    %53 = vmatprep.subr.mxu0 0.0
    %54 = vmatpush1.msra.mxu0 %v26
    %55 = vmatprep.subr.mxu0 0.0
    %56 = vmatpush1.msra.mxu0 %v27
    %57 = vmatprep.subr.mxu0 0.0
    %58 = vmatpush1.msra.mxu0 %v28
    %59 = vmatprep.subr.mxu0 0.0
    %60 = vmatpush1.msra.mxu0 %v29
    %61 = vmatprep.subr.mxu0 0.0
    %62 = vmatpush1.msra.mxu0 %v30
    %63 = vmatprep.subr.mxu0 0.0
    %64 = vmatpush1.msra.mxu0 %v31
    %65 = vmatprep.subr.mxu0 0.0
    %66 = vmatpush1.msra.mxu0 %v32
    %67 = vmatprep.subr.mxu0 0.0
    %68 = vmatpush1.msra.mxu0 %v33
    %69 = vmatprep.subr.mxu0 0.0
    %70 = vmatpush1.msra.mxu0 %v34
    %71 = vmatprep.subr.mxu0 0.0
    %72 = vmatpush1.msra.mxu0 0.0
    %73 = vmatprep.subr.mxu0 0.0
    %74 = vmatpush1.msra.mxu0 0.0
    %75 = vmatprep.subr.mxu0 0.0
    %76 = vmatpush1.msra.mxu0 0.0
    %77 = vmatprep.subr.mxu0 0.0
    %78 = vmatpush1.msra.mxu0 0.0
    %79 = vmatprep.subr.mxu0 0.0
    %80 = vmatpush1.msra.mxu0 0.0
    %81 = vmatprep.subr.mxu0 0.0
    %82 = vmatpush1.msra.mxu0 0.0
    %83 = vmatprep.subr.mxu0 0.0
    %84 = vmatpush1.msra.mxu0 0.0
    %85 = vmatprep.subr.mxu0 0.0
    %86 = vmatpush1.msra.mxu0 0.0
    %87 = vmatprep.subr.mxu0 0.0
    %88 = vmatpush1.msra.mxu0 0.0
    %89 = vmatprep.subr.mxu0 0.0
    %90 = vmatpush1.msra.mxu0 0.0
    %91 = vmatprep.subr.mxu0 0.0
    %92 = vmatpush1.msra.mxu0 0.0
    %93 = vmatprep.subr.mxu0 0.0
    %94 = vmatpush1.msra.mxu0 0.0
    %95 = vmatprep.subr.mxu0 0.0
    %96 = vmatpush1.msra.mxu0 0.0
    %97 = vmatprep.subr.mxu0 0.0
    %98 = vmatpush1.msra.mxu0 0.0
    %99 = vmatprep.subr.mxu0 0.0
    %100 = vmatpush1.msra.mxu0 0.0
    %101 = vmatprep.subr.mxu0 0.0
    %102 = vmatpush1.msra.mxu0 0.0
    %103 = vmatprep.mubr.f32.mxu0 0.0
    %104 = vmatmul.mubr.f32.gmra.mrb[0].mxu0 %v35
    %v105 = vpop.f32.mrb[0].mxu0
    %v106 = vadd.f32 0.0, %v105
    %v107 = vpop.f32.mrb[0].mxu0
    %108 = vmatprep.mubr.f32.mxu0 0.0
    %109 = vmatmul.mubr.f32.gmra.mrb[0].mxu0 %v36
    %v110 = vpop.f32.mrb[0].mxu0
    %v111 = vadd.f32 0.0, %v110
    %v112 = vpop.f32.mrb[0].mxu0
    %113 = vdwg.mxu0
    %114 = vmatprep.subr.mxu0 0.0
    %115 = vmatpush1.msra.mxu0 %v19
    %116 = vmatprep.subr.mxu0 0.0
    %117 = vmatpush1.msra.mxu0 %v20
    %118 = vmatprep.subr.mxu0 0.0
    %119 = vmatpush1.msra.mxu0 %v21
    %120 = vmatprep.subr.mxu0 0.0
    %121 = vmatpush1.msra.mxu0 %v22
    %122 = vmatprep.subr.mxu0 0.0
    %123 = vmatpush1.msra.mxu0 %v23
    %124 = vmatprep.subr.mxu0 0.0
    %125 = vmatpush1.msra.mxu0 %v24
    %126 = vmatprep.subr.mxu0 0.0
    %127 = vmatpush1.msra.mxu0 %v25
    %128 = vmatprep.subr.mxu0 0.0
    %129 = vmatpush1.msra.mxu0 %v26
    %130 = vmatprep.subr.mxu0 0.0
    %131 = vmatpush1.msra.mxu0 %v27
    %132 = vmatprep.subr.mxu0 0.0
    %133 = vmatpush1.msra.mxu0 %v28
    %134 = vmatprep.subr.mxu0 0.0
    %135 = vmatpush1.msra.mxu0 %v29
    %136 = vmatprep.subr.mxu0 0.0
    %137 = vmatpush1.msra.mxu0 %v30
    %138 = vmatprep.subr.mxu0 0.0
    %139 = vmatpush1.msra.mxu0 %v31
    %140 = vmatprep.subr.mxu0 0.0
    %141 = vmatpush1.msra.mxu0 %v32
    %142 = vmatprep.subr.mxu0 0.0
    %143 = vmatpush1.msra.mxu0 %v33
    %144 = vmatprep.subr.mxu0 0.0
    %145 = vmatpush1.msra.mxu0 %v34
    %146 = vmatprep.subr.mxu0 0.0
    %147 = vmatpush1.msra.mxu0 0.0
    %148 = vmatprep.subr.mxu0 0.0
    %149 = vmatpush1.msra.mxu0 0.0
    %150 = vmatprep.subr.mxu0 0.0
    %151 = vmatpush1.msra.mxu0 0.0
    %152 = vmatprep.subr.mxu0 0.0
    %153 = vmatpush1.msra.mxu0 0.0
    %154 = vmatprep.subr.mxu0 0.0
    %155 = vmatpush1.msra.mxu0 0.0
    %156 = vmatprep.subr.mxu0 0.0
    %157 = vmatpush1.msra.mxu0 0.0
    %158 = vmatprep.subr.mxu0 0.0
    %159 = vmatpush1.msra.mxu0 0.0
    %160 = vmatprep.subr.mxu0 0.0
    %161 = vmatpush1.msra.mxu0 0.0
    %162 = vmatprep.subr.mxu0 0.0
    %163 = vmatpush1.msra.mxu0 0.0
    %164 = vmatprep.subr.mxu0 0.0
    %165 = vmatpush1.msra.mxu0 0.0
    %166 = vmatprep.subr.mxu0 0.0
    %167 = vmatpush1.msra.mxu0 0.0
    %168 = vmatprep.subr.mxu0 0.0
    %169 = vmatpush1.msra.mxu0 0.0
    %170 = vmatprep.subr.mxu0 0.0
    %171 = vmatpush1.msra.mxu0 0.0
    %172 = vmatprep.subr.mxu0 0.0
    %173 = vmatpush1.msra.mxu0 0.0
    %174 = vmatprep.subr.mxu0 0.0
    %175 = vmatpush1.msra.mxu0 0.0
    %176 = vmatprep.subr.mxu0 0.0
    %177 = vmatpush1.msra.mxu0 0.0
    %178 = vmatprep.mubr.f32.mxu0 0.0
    %179 = vmatmul.mubr.f32.gmra.mrb[0].mxu0 %v37
    %v180 = vpop.f32.mrb[0].mxu0
    %v181 = vadd.f32 0.0, %v180
    %v182 = vpop.f32.mrb[0].mxu0
    %183 = vmatprep.mubr.f32.mxu0 0.0
    %184 = vmatmul.mubr.f32.gmra.mrb[0].mxu0 %v38
    %v185 = vpop.f32.mrb[0].mxu0
    %v186 = vadd.f32 0.0, %v185
    %v187 = vpop.f32.mrb[0].mxu0
    %188 = vdwg.mxu0
    %v189 = vmul.f32 %v35, %v37
    %v190 = vmul.f32 %v36, %v38
    %191 = vmatprep.subr.mxu0 0.0
    %192 = vmatpush1.msra.mxu0 %v19
    %193 = vmatprep.subr.mxu0 0.0
    %194 = vmatpush1.msra.mxu0 %v20
    %195 = vmatprep.subr.mxu0 0.0
    %196 = vmatpush1.msra.mxu0 %v21
    %197 = vmatprep.subr.mxu0 0.0
    %198 = vmatpush1.msra.mxu0 %v22
    %199 = vmatprep.subr.mxu0 0.0
    %200 = vmatpush1.msra.mxu0 %v23
    %201 = vmatprep.subr.mxu0 0.0
    %202 = vmatpush1.msra.mxu0 %v24
    %203 = vmatprep.subr.mxu0 0.0
    %204 = vmatpush1.msra.mxu0 %v25
    %205 = vmatprep.subr.mxu0 0.0
    %206 = vmatpush1.msra.mxu0 %v26
    %207 = vmatprep.subr.mxu0 0.0
    %208 = vmatpush1.msra.mxu0 %v27
    %209 = vmatprep.subr.mxu0 0.0
    %210 = vmatpush1.msra.mxu0 %v28
    %211 = vmatprep.subr.mxu0 0.0
    %212 = vmatpush1.msra.mxu0 %v29
    %213 = vmatprep.subr.mxu0 0.0
    %214 = vmatpush1.msra.mxu0 %v30
    %215 = vmatprep.subr.mxu0 0.0
    %216 = vmatpush1.msra.mxu0 %v31
    %217 = vmatprep.subr.mxu0 0.0
    %218 = vmatpush1.msra.mxu0 %v32
    %219 = vmatprep.subr.mxu0 0.0
    %220 = vmatpush1.msra.mxu0 %v33
    %221 = vmatprep.subr.mxu0 0.0
    %222 = vmatpush1.msra.mxu0 %v34
    %223 = vmatprep.subr.mxu0 0.0
    %224 = vmatpush1.msra.mxu0 0.0
    %225 = vmatprep.subr.mxu0 0.0
    %226 = vmatpush1.msra.mxu0 0.0
    %227 = vmatprep.subr.mxu0 0.0
    %228 = vmatpush1.msra.mxu0 0.0
    %229 = vmatprep.subr.mxu0 0.0
    %230 = vmatpush1.msra.mxu0 0.0
    %231 = vmatprep.subr.mxu0 0.0
    %232 = vmatpush1.msra.mxu0 0.0
    %233 = vmatprep.subr.mxu0 0.0
    %234 = vmatpush1.msra.mxu0 0.0
    %235 = vmatprep.subr.mxu0 0.0
    %236 = vmatpush1.msra.mxu0 0.0
    %237 = vmatprep.subr.mxu0 0.0
    %238 = vmatpush1.msra.mxu0 0.0
    %239 = vmatprep.subr.mxu0 0.0
    %240 = vmatpush1.msra.mxu0 0.0
    %241 = vmatprep.subr.mxu0 0.0
    %242 = vmatpush1.msra.mxu0 0.0
    %243 = vmatprep.subr.mxu0 0.0
    %244 = vmatpush1.msra.mxu0 0.0
    %245 = vmatprep.subr.mxu0 0.0
    %246 = vmatpush1.msra.mxu0 0.0
    %247 = vmatprep.subr.mxu0 0.0
    %248 = vmatpush1.msra.mxu0 0.0
    %249 = vmatprep.subr.mxu0 0.0
    %250 = vmatpush1.msra.mxu0 0.0
    %251 = vmatprep.subr.mxu0 0.0
    %252 = vmatpush1.msra.mxu0 0.0
    %253 = vmatprep.subr.mxu0 0.0
    %254 = vmatpush1.msra.mxu0 0.0
    %255 = vmatprep.mubr.f32.mxu0 0.0
    %256 = vmatmul.mubr.f32.gmra.mrb[0].mxu0 %v189
    %v257 = vpop.f32.mrb[0].mxu0
    %v258 = vadd.f32 0.0, %v257
    %v259 = vpop.f32.mrb[0].mxu0
    %260 = vmatprep.mubr.f32.mxu0 0.0
    %261 = vmatmul.mubr.f32.gmra.mrb[0].mxu0 %v190
    %v262 = vpop.f32.mrb[0].mxu0
    %v263 = vadd.f32 0.0, %v262
    %v264 = vpop.f32.mrb[0].mxu0
    %265 = vdwg.mxu0
    %v266 = vmul.f32 %v106, %v181
    %v267 = vmul.f32 %v111, %v186
    %v268 = vsub.f32 %v258, %v266
    %v269 = vsub.f32 %v263, %v267
    %v270 = vand.u32 2147483647, %v106
    %v271 = vand.u32 2147483647, %v111
    %v272 = vand.u32 2147483647, %v268
    %v273 = vand.u32 2147483647, %v269
    %v274 = vadd.f32 %v270, %v272
    %v275 = vadd.f32 %v271, %v273
    %vm276 = vcmask 64512
    %v277 = vsel %vm276, %v274, 0.0
    %v278 = vsel %vm276, %v275, 0.0
    %v279 = vadd.f32 %v277, %v278
    %280 = vadd.xlane.f32.xlu0 %v279
    %v281 = vpop.xlane.xlu0 %280
    %v282 = vrot.slane %v281, 4
    %v283 = vadd.f32 %v281, %v282
    %v284 = vrot.slane %v283, 2
    %v285 = vadd.f32 %v283, %v284
    %v286 = vrot.slane %v285, 1
    %v287 = vadd.f32 %v285, %v286
    %s288 = vtos %v287
    %v289 = vstv %s288
    %290 = vst [vmem:[#allocation2] sm:$0x1] %v289
    // Predicated region
    $region14: #{tpu_custom_call.1} parent=1 // pred_check
      _
    $region15: #{tpu_custom_call.1} parent=1 // pred_check_branch
      %292 = sbr.rel (0) target = $region17
    $region16: #{tpu_custom_call.1} parent=1 // pred_region
      %s294 = ssub.s32 16, 16
      %295 = vsyncadd [#allocation3], %s294
      %s297 = sshll.u32 [#allocation2], 4
      %s298 = int_to_ptr.vmem [resolvable:$true] %s297
      %300 = dma.vmem_to_hbm [thread:$0]  %s298, 16, %s3, [#allocation3]
    $region17: #{tpu_custom_call.1} parent=1 // pred_fallthru
      _
    // Predicated region
    $region18: #{tpu_custom_call.1} parent=1 // pred_check
      _
    $region19: #{tpu_custom_call.1} parent=1 // pred_check_branch
      %302 = sbr.rel (0) target = $region21
    $region20: #{tpu_custom_call.1} parent=1 // pred_region
      %303 = dma.done [#allocation3], 16
    $region21: #{tpu_custom_call.1} parent=1 // pred_fallthru
      _
    %304 = vsyncpa [#allocation3], 1

</llo_original>
